<compile_context>
chip_gen: v7x
topology: tpu7x:2x2x1
jax: 0.10.0
libtpu: 0.0.40
codegen_flags: <defaults>
</compile_context>

<pallas_src>
import functools

import jax
import jax.numpy as jnp
from jax.experimental import pallas as pl
from jax.experimental.pallas import tpu as pltpu

HIDDEN = 10    # hidden width of TestModel
LANES = 512    # lane-dense last dim (multiple of 128)
MAX_TR = 1024  # max sublane rows per block -> 1024*512*4 B = 2 MiB per block


def mlp_kernel(params_ref, x_ref, o_ref, *, compute_dtype=jnp.float32):
    """Elementwise 1->10->1 MLP on one lane-dense tile.

    params_ref : SMEM float32[3*HIDDEN + 1] = [w1(10), b1(10), w2(10), b2(1)]
    x_ref/o_ref: VMEM float32[TR, TC]; each element is one batch row.
    """
    x = x_ref[...].astype(compute_dtype)

    def w1(j): return params_ref[j].astype(compute_dtype)
    def b1(j): return params_ref[HIDDEN + j].astype(compute_dtype)
    def w2(j): return params_ref[2 * HIDDEN + j].astype(compute_dtype)
    b2 = params_ref[3 * HIDDEN].astype(compute_dtype)

    # Fold the j == 0 term and the output bias into the accumulator init
    # (removes the zeros splat/add and the trailing bias add on the VALU path).
    acc = jnp.maximum(x * w1(0) + b1(0), 0) * w2(0) + b2
    # Hidden dim is tiny and static -> fully unrolled VPU-only loop (no MXU).
    # ~30 hoisted scalar splats + a few tile temps fit within the 64 vregs.
    for j in range(1, HIDDEN):
        acc = acc + jnp.maximum(x * w1(j) + b1(j), 0) * w2(j)
    o_ref[...] = acc.astype(o_ref.dtype)


def _grid_semantics(num_tiles):
    """Shard row tiles across both TensorCores on v7x; plain 'parallel'
    elsewhere (v5e/v6e have a single TC, where it is only a pipelining hint)."""
    try:
        kind = jax.devices()[0].device_kind.lower()
    except Exception:  # pragma: no cover - defensive, never expected on TPU
        kind = ""
    if ("v7" in kind) and num_tiles >= 2 and num_tiles % 2 == 0:
        return (pltpu.CORE_PARALLEL,)
    return ("parallel",)


def test_model_forward(x, w1, b1, w2, b2, *, tc=LANES, tr=None,
                       compute_dtype=jnp.float32):
    """x: (B, 1) float32 -> (B, 1) float32 (same semantics as TestModel.forward).

    compute_dtype=jnp.bfloat16 is an opt-in fast path for v6e/v7x (packed bf16
    VPU); it deviates from the f32 reference by ~1e-2 relative, so keep the
    default f32 when bit-level parity with PyTorch matters (and on v5e).
    """
    B = x.shape[0]

    # Pack the 31 parameter scalars into one tiny SMEM-resident array.
    params = jnp.concatenate(
        [w1.reshape(-1), b1.reshape(-1), w2.reshape(-1), b2.reshape(-1)]
    ).astype(jnp.float32)

    xf = x.reshape(-1).astype(jnp.float32)

    # Lane-dense slab (rows, tc).  Fast path: B % tc == 0 -> metadata-only
    # reshape (no jnp.pad, and the trailing [:B] slice is skipped below).
    pad = (-B) % tc
    if pad:
        xf = jnp.pad(xf, (0, pad))
    rows = (B + pad) // tc
    x2d = xf.reshape(rows, tc)

    if tr is None:
        # Biggest block that does not exceed the data, capped at 2 MiB
        # (MAX_TR x 512 f32); sublane dim kept a multiple of 8.
        tr = max(8, min(MAX_TR, pl.cdiv(rows, 8) * 8))
    grid = (pl.cdiv(rows, tr),)   # partial last row-block is masked by Pallas

    y2d = pl.pallas_call(
        functools.partial(mlp_kernel, compute_dtype=compute_dtype),
        out_shape=jax.ShapeDtypeStruct((rows, tc), jnp.float32),
        grid_spec=pltpu.PrefetchScalarGridSpec(
            num_scalar_prefetch=0,
            grid=grid,
            in_specs=[
                pl.BlockSpec(memory_space=pltpu.MemorySpace.SMEM),  # params
                pl.BlockSpec((tr, tc), lambda i: (i, 0)),           # x tiles
            ],
            out_specs=pl.BlockSpec((tr, tc), lambda i: (i, 0)),
        ),
        compiler_params=pltpu.CompilerParams(
            dimension_semantics=_grid_semantics(grid[0]),
        ),
    )(params, x2d)

    yf = y2d.reshape(-1)
    if pad:
        yf = yf[:B]
    return yf.reshape(B, 1)


def init_params(key):
    """PyTorch-style init; weights stored transposed as (in, out) for x @ W."""
    k1, k2, k3, k4 = jax.random.split(key, 4)
    bound1 = 1.0 / jnp.sqrt(1.0)   # fan_in = 1
    bound2 = 1.0 / jnp.sqrt(10.0)  # fan_in = 10
    w1 = jax.random.uniform(k1, (1, HIDDEN), jnp.float32, -bound1, bound1)
    b1 = jax.random.uniform(k2, (HIDDEN,), jnp.float32, -bound1, bound1)
    w2 = jax.random.uniform(k3, (HIDDEN, 1), jnp.float32, -bound2, bound2)
    b2 = jax.random.uniform(k4, (1,), jnp.float32, -bound2, bound2)
    return w1, b1, w2, b2


def _reference(x, w1, b1, w2, b2):
    return jnp.maximum(x @ w1 + b1, 0.0) @ w2 + b2


if __name__ == "__main__":
    key = jax.random.PRNGKey(0)
    k_x1, k_x2, k_x3, k_x4, k_p = jax.random.split(key, 5)
    w1, b1, w2, b2 = init_params(k_p)

    def check(x, **kw):
        y = jax.block_until_ready(test_model_forward(x, w1, b1, w2, b2, **kw))
        assert y.shape == x.shape
        assert jnp.allclose(y, _reference(x, w1, b1, w2, b2),
                            atol=1e-5, rtol=1e-5)

    # Tiny batch (single partial block in the sublane dim).
    check(jax.random.normal(k_x1, (8, 1), dtype=jnp.float32))
    # Ragged batch (pad to a lane multiple + masked partial row-block).
    check(jax.random.normal(k_x2, (1027, 1), dtype=jnp.float32))
    # Fast path: batch a multiple of LANES -> no pad and no trailing slice.
    check(jax.random.normal(k_x3, (2048, 1), dtype=jnp.float32))
    # Multi-step grid with a ragged final row-block (forced small tile).
    check(jax.random.normal(k_x4, (4224, 1), dtype=jnp.float32), tc=128, tr=8)

    print("KERNEL_OK")
</pallas_src>

<mosaic_0001>
module attributes {stable_mosaic.version = 11 : i64} {
  func.func @mlp_kernel(%arg0: i32, %arg1: memref<31xf32, #tpu.memory_space<smem>>, %arg2: memref<8x512xf32, #tpu.memory_space<vmem>>, %arg3: memref<8x512xf32, #tpu.memory_space<vmem>>) attributes {dimension_semantics = [#tpu.dimension_semantics<parallel>], iteration_bounds = array<i64: 1>, scalar_prefetch = 0 : i64, scratch_operands = 0 : i64, tpu.core_type = #tpu.core_type<tc>, window_params = [{transform_indices = @transform_0, window_bounds = array<i64: 31>}, {transform_indices = @transform_1, window_bounds = array<i64: 8, 512>}, {transform_indices = @transform_2, window_bounds = array<i64: 8, 512>}]} {
    %c0 = arith.constant 0 : index
    %c0_0 = arith.constant 0 : index
    %0 = vector.load %arg2[%c0, %c0_0] : memref<8x512xf32, #tpu.memory_space<vmem>>, vector<8x512xf32>
    %c30 = arith.constant 30 : index
    %1 = memref.load %arg1[%c30] : memref<31xf32, #tpu.memory_space<smem>>
    %c0_1 = arith.constant 0 : index
    %2 = memref.load %arg1[%c0_1] : memref<31xf32, #tpu.memory_space<smem>>
    %3 = vector.broadcast %2 : f32 to vector<8x512xf32>
    %4 = arith.mulf %0, %3 : vector<8x512xf32>
    %c10 = arith.constant 10 : index
    %5 = memref.load %arg1[%c10] : memref<31xf32, #tpu.memory_space<smem>>
    %6 = vector.broadcast %5 : f32 to vector<8x512xf32>
    %7 = arith.addf %4, %6 : vector<8x512xf32>
    %cst = arith.constant 0.000000e+00 : f32
    %8 = vector.broadcast %cst : f32 to vector<8x512xf32>
    %9 = arith.maximumf %7, %8 : vector<8x512xf32>
    %c20 = arith.constant 20 : index
    %10 = memref.load %arg1[%c20] : memref<31xf32, #tpu.memory_space<smem>>
    %11 = vector.broadcast %10 : f32 to vector<8x512xf32>
    %12 = arith.mulf %9, %11 : vector<8x512xf32>
    %13 = vector.broadcast %1 : f32 to vector<8x512xf32>
    %14 = arith.addf %12, %13 : vector<8x512xf32>
    %c1 = arith.constant 1 : index
    %15 = memref.load %arg1[%c1] : memref<31xf32, #tpu.memory_space<smem>>
    %16 = vector.broadcast %15 : f32 to vector<8x512xf32>
    %17 = arith.mulf %0, %16 : vector<8x512xf32>
    %c11 = arith.constant 11 : index
    %18 = memref.load %arg1[%c11] : memref<31xf32, #tpu.memory_space<smem>>
    %19 = vector.broadcast %18 : f32 to vector<8x512xf32>
    %20 = arith.addf %17, %19 : vector<8x512xf32>
    %cst_2 = arith.constant 0.000000e+00 : f32
    %21 = vector.broadcast %cst_2 : f32 to vector<8x512xf32>
    %22 = arith.maximumf %20, %21 : vector<8x512xf32>
    %c21 = arith.constant 21 : index
    %23 = memref.load %arg1[%c21] : memref<31xf32, #tpu.memory_space<smem>>
    %24 = vector.broadcast %23 : f32 to vector<8x512xf32>
    %25 = arith.mulf %22, %24 : vector<8x512xf32>
    %26 = arith.addf %14, %25 : vector<8x512xf32>
    %c2 = arith.constant 2 : index
    %27 = memref.load %arg1[%c2] : memref<31xf32, #tpu.memory_space<smem>>
    %28 = vector.broadcast %27 : f32 to vector<8x512xf32>
    %29 = arith.mulf %0, %28 : vector<8x512xf32>
    %c12 = arith.constant 12 : index
    %30 = memref.load %arg1[%c12] : memref<31xf32, #tpu.memory_space<smem>>
    %31 = vector.broadcast %30 : f32 to vector<8x512xf32>
    %32 = arith.addf %29, %31 : vector<8x512xf32>
    %cst_3 = arith.constant 0.000000e+00 : f32
    %33 = vector.broadcast %cst_3 : f32 to vector<8x512xf32>
    %34 = arith.maximumf %32, %33 : vector<8x512xf32>
    %c22 = arith.constant 22 : index
    %35 = memref.load %arg1[%c22] : memref<31xf32, #tpu.memory_space<smem>>
    %36 = vector.broadcast %35 : f32 to vector<8x512xf32>
    %37 = arith.mulf %34, %36 : vector<8x512xf32>
    %38 = arith.addf %26, %37 : vector<8x512xf32>
    %c3 = arith.constant 3 : index
    %39 = memref.load %arg1[%c3] : memref<31xf32, #tpu.memory_space<smem>>
    %40 = vector.broadcast %39 : f32 to vector<8x512xf32>
    %41 = arith.mulf %0, %40 : vector<8x512xf32>
    %c13 = arith.constant 13 : index
    %42 = memref.load %arg1[%c13] : memref<31xf32, #tpu.memory_space<smem>>
    %43 = vector.broadcast %42 : f32 to vector<8x512xf32>
    %44 = arith.addf %41, %43 : vector<8x512xf32>
    %cst_4 = arith.constant 0.000000e+00 : f32
    %45 = vector.broadcast %cst_4 : f32 to vector<8x512xf32>
    %46 = arith.maximumf %44, %45 : vector<8x512xf32>
    %c23 = arith.constant 23 : index
    %47 = memref.load %arg1[%c23] : memref<31xf32, #tpu.memory_space<smem>>
    %48 = vector.broadcast %47 : f32 to vector<8x512xf32>
    %49 = arith.mulf %46, %48 : vector<8x512xf32>
    %50 = arith.addf %38, %49 : vector<8x512xf32>
    %c4 = arith.constant 4 : index
    %51 = memref.load %arg1[%c4] : memref<31xf32, #tpu.memory_space<smem>>
    %52 = vector.broadcast %51 : f32 to vector<8x512xf32>
    %53 = arith.mulf %0, %52 : vector<8x512xf32>
    %c14 = arith.constant 14 : index
    %54 = memref.load %arg1[%c14] : memref<31xf32, #tpu.memory_space<smem>>
    %55 = vector.broadcast %54 : f32 to vector<8x512xf32>
    %56 = arith.addf %53, %55 : vector<8x512xf32>
    %cst_5 = arith.constant 0.000000e+00 : f32
    %57 = vector.broadcast %cst_5 : f32 to vector<8x512xf32>
    %58 = arith.maximumf %56, %57 : vector<8x512xf32>
    %c24 = arith.constant 24 : index
    %59 = memref.load %arg1[%c24] : memref<31xf32, #tpu.memory_space<smem>>
    %60 = vector.broadcast %59 : f32 to vector<8x512xf32>
    %61 = arith.mulf %58, %60 : vector<8x512xf32>
    %62 = arith.addf %50, %61 : vector<8x512xf32>
    %c5 = arith.constant 5 : index
    %63 = memref.load %arg1[%c5] : memref<31xf32, #tpu.memory_space<smem>>
    %64 = vector.broadcast %63 : f32 to vector<8x512xf32>
    %65 = arith.mulf %0, %64 : vector<8x512xf32>
    %c15 = arith.constant 15 : index
    %66 = memref.load %arg1[%c15] : memref<31xf32, #tpu.memory_space<smem>>
    %67 = vector.broadcast %66 : f32 to vector<8x512xf32>
    %68 = arith.addf %65, %67 : vector<8x512xf32>
    %cst_6 = arith.constant 0.000000e+00 : f32
    %69 = vector.broadcast %cst_6 : f32 to vector<8x512xf32>
    %70 = arith.maximumf %68, %69 : vector<8x512xf32>
    %c25 = arith.constant 25 : index
    %71 = memref.load %arg1[%c25] : memref<31xf32, #tpu.memory_space<smem>>
    %72 = vector.broadcast %71 : f32 to vector<8x512xf32>
    %73 = arith.mulf %70, %72 : vector<8x512xf32>
    %74 = arith.addf %62, %73 : vector<8x512xf32>
    %c6 = arith.constant 6 : index
    %75 = memref.load %arg1[%c6] : memref<31xf32, #tpu.memory_space<smem>>
    %76 = vector.broadcast %75 : f32 to vector<8x512xf32>
    %77 = arith.mulf %0, %76 : vector<8x512xf32>
    %c16 = arith.constant 16 : index
    %78 = memref.load %arg1[%c16] : memref<31xf32, #tpu.memory_space<smem>>
    %79 = vector.broadcast %78 : f32 to vector<8x512xf32>
    %80 = arith.addf %77, %79 : vector<8x512xf32>
    %cst_7 = arith.constant 0.000000e+00 : f32
    %81 = vector.broadcast %cst_7 : f32 to vector<8x512xf32>
    %82 = arith.maximumf %80, %81 : vector<8x512xf32>
    %c26 = arith.constant 26 : index
    %83 = memref.load %arg1[%c26] : memref<31xf32, #tpu.memory_space<smem>>
    %84 = vector.broadcast %83 : f32 to vector<8x512xf32>
    %85 = arith.mulf %82, %84 : vector<8x512xf32>
    %86 = arith.addf %74, %85 : vector<8x512xf32>
    %c7 = arith.constant 7 : index
    %87 = memref.load %arg1[%c7] : memref<31xf32, #tpu.memory_space<smem>>
    %88 = vector.broadcast %87 : f32 to vector<8x512xf32>
    %89 = arith.mulf %0, %88 : vector<8x512xf32>
    %c17 = arith.constant 17 : index
    %90 = memref.load %arg1[%c17] : memref<31xf32, #tpu.memory_space<smem>>
    %91 = vector.broadcast %90 : f32 to vector<8x512xf32>
    %92 = arith.addf %89, %91 : vector<8x512xf32>
    %cst_8 = arith.constant 0.000000e+00 : f32
    %93 = vector.broadcast %cst_8 : f32 to vector<8x512xf32>
    %94 = arith.maximumf %92, %93 : vector<8x512xf32>
    %c27 = arith.constant 27 : index
    %95 = memref.load %arg1[%c27] : memref<31xf32, #tpu.memory_space<smem>>
    %96 = vector.broadcast %95 : f32 to vector<8x512xf32>
    %97 = arith.mulf %94, %96 : vector<8x512xf32>
    %98 = arith.addf %86, %97 : vector<8x512xf32>
    %c8 = arith.constant 8 : index
    %99 = memref.load %arg1[%c8] : memref<31xf32, #tpu.memory_space<smem>>
    %100 = vector.broadcast %99 : f32 to vector<8x512xf32>
    %101 = arith.mulf %0, %100 : vector<8x512xf32>
    %c18 = arith.constant 18 : index
    %102 = memref.load %arg1[%c18] : memref<31xf32, #tpu.memory_space<smem>>
    %103 = vector.broadcast %102 : f32 to vector<8x512xf32>
    %104 = arith.addf %101, %103 : vector<8x512xf32>
    %cst_9 = arith.constant 0.000000e+00 : f32
    %105 = vector.broadcast %cst_9 : f32 to vector<8x512xf32>
    %106 = arith.maximumf %104, %105 : vector<8x512xf32>
    %c28 = arith.constant 28 : index
    %107 = memref.load %arg1[%c28] : memref<31xf32, #tpu.memory_space<smem>>
    %108 = vector.broadcast %107 : f32 to vector<8x512xf32>
    %109 = arith.mulf %106, %108 : vector<8x512xf32>
    %110 = arith.addf %98, %109 : vector<8x512xf32>
    %c9 = arith.constant 9 : index
    %111 = memref.load %arg1[%c9] : memref<31xf32, #tpu.memory_space<smem>>
    %112 = vector.broadcast %111 : f32 to vector<8x512xf32>
    %113 = arith.mulf %0, %112 : vector<8x512xf32>
    %c19 = arith.constant 19 : index
    %114 = memref.load %arg1[%c19] : memref<31xf32, #tpu.memory_space<smem>>
    %115 = vector.broadcast %114 : f32 to vector<8x512xf32>
    %116 = arith.addf %113, %115 : vector<8x512xf32>
    %cst_10 = arith.constant 0.000000e+00 : f32
    %117 = vector.broadcast %cst_10 : f32 to vector<8x512xf32>
    %118 = arith.maximumf %116, %117 : vector<8x512xf32>
    %c29 = arith.constant 29 : index
    %119 = memref.load %arg1[%c29] : memref<31xf32, #tpu.memory_space<smem>>
    %120 = vector.broadcast %119 : f32 to vector<8x512xf32>
    %121 = arith.mulf %118, %120 : vector<8x512xf32>
    %122 = arith.addf %110, %121 : vector<8x512xf32>
    %c0_11 = arith.constant 0 : index
    %c0_12 = arith.constant 0 : index
    %123 = vector.load %arg3[%c0_11, %c0_12] : memref<8x512xf32, #tpu.memory_space<vmem>>, vector<8x512xf32>
    tpu.vector_store %arg3[%c0_11, %c0_12], %122 {strides = array<i32>} : memref<8x512xf32, #tpu.memory_space<vmem>>, vector<8x512xf32>,
    return
  }
  func.func @transform_0(%arg0: i32) -> i32 {
    %c0_i32 = arith.constant 0 : i32
    %c0_i32_0 = arith.constant 0 : i32
    return %c0_i32 : i32
  }
  func.func @transform_1(%arg0: i32) -> (i32, i32) {
    %c0_i32 = arith.constant 0 : i32
    %c0_i32_0 = arith.constant 0 : i32
    return %arg0, %c0_i32 : i32, i32
  }
  func.func @transform_2(%arg0: i32) -> (i32, i32) {
    %c0_i32 = arith.constant 0 : i32
    %c0_i32_0 = arith.constant 0 : i32
    return %arg0, %c0_i32 : i32, i32
  }
}

</mosaic_0001>

<llo_original>
// kernel: tpu_custom_call.1
$region0: #{tpu_custom_call.1}
  #allocation0 [shape = 'u32[]', space=smem, size = 0x4, offset = 0x4, fixed_abs, tag = 'smem constant byte address 0x4 - core index']
  #allocation1 [shape = 'u32[144,128]{1,0:T(1,128)}', space=vmem, size = 0x12000, scoped, tag = 'internal scratch']
  %s0 = inlined_call_operand.hbm [shape: f32[31], index: 0, kind: input, shape index: {}]
  %s1 = inlined_call_operand.hbm [shape: f32[1,512], index: 1, kind: input, shape index: {}]
  %s2 = inlined_call_operand.hbm [shape: f32[1,512], index: 2, kind: output, shape index: {}]
  %s3 = sld [smem:[#allocation0]]
  $region26: #{tpu_custom_call.1} parent=0
    _
  %s5 = ssub.s32 1, %s3
  %s6 = scalar_select 0, %s5, %s3
  $region1: #{tpu_custom_call.1} parent=0
    #allocation2 [shape = 'u8[512]{0}', space=smem, size = 0x200, scoped, tag = 'input window, operand 0, single buffered']
    #allocation3 [shape = 's32[1]{0}', space=sflag, size = 0x4, scoped, tag = 'scoped memory for tpu_custom_call.1']
    #allocation4 [shape = 's32[1]{0}', space=sflag, size = 0x4, scoped, tag = 'scoped memory for tpu_custom_call.1']
    #allocation5 [shape = 's32[1]{0}', space=sflag, size = 0x4, scoped, tag = 'scoped memory for tpu_custom_call.1']
    #allocation6 [shape = 'u8[16384]{0}', space=vmem, size = 0x4000, scoped, tag = 'input window, operand 1, single buffered']
    #allocation7 [shape = 'u8[16384]{0}', space=vmem, size = 0x4000, scoped, tag = 'output window, operand 0, single buffered']
    %7 = vsyncpa [#allocation5], 0
    %8 = vsyncpa [#allocation3], 0
    %9 = vsyncpa [#allocation4], 0
    // Predicated region
    $region2: #{tpu_custom_call.1} parent=1 // pred_check
      _
    $region3: #{tpu_custom_call.1} parent=1 // pred_check_branch
      %11 = sbr.rel (0) target = $region5
    $region4: #{tpu_custom_call.1} parent=1 // pred_region
      %s13 = ssub.s32 16, 16
      %14 = vsyncadd [#allocation5], %s13
      %17 = dma.hbm_to_smem %s0, 16, [#allocation2], [#allocation5]
    $region5: #{tpu_custom_call.1} parent=1 // pred_fallthru
      _
    // Predicated region
    $region6: #{tpu_custom_call.1} parent=1 // pred_check
      _
    $region7: #{tpu_custom_call.1} parent=1 // pred_check_branch
      %19 = sbr.rel (0) target = $region9
    $region8: #{tpu_custom_call.1} parent=1 // pred_region
      %s21 = ssub.s32 512, 64
      %22 = vsyncadd [#allocation3], %s21
      %s23 = sshll.u32 [#allocation6], 4
      %s24 = int_to_ptr.vmem [resolvable:$true] %s23
      %29 = dma.hbm_to_vmem [thread:$0]  %s1, 64, %s24, [#allocation3], 64, 64, 4
    $region9: #{tpu_custom_call.1} parent=1 // pred_fallthru
      _
    // Predicated region
    $region10: #{tpu_custom_call.1} parent=1 // pred_check
      _
    $region11: #{tpu_custom_call.1} parent=1 // pred_check_branch
      %31 = sbr.rel (0) target = $region13
    $region12: #{tpu_custom_call.1} parent=1 // pred_region
      %32 = dma.done [#allocation5], 16
    $region13: #{tpu_custom_call.1} parent=1 // pred_fallthru
      _
    // Predicated region
    $region14: #{tpu_custom_call.1} parent=1 // pred_check
      _
    $region15: #{tpu_custom_call.1} parent=1 // pred_check_branch
      %34 = sbr.rel (0) target = $region17
    $region16: #{tpu_custom_call.1} parent=1 // pred_region
      %35 = dma.done [#allocation3], 512
    $region17: #{tpu_custom_call.1} parent=1 // pred_fallthru
      _
    %36 = sfence
    %v37 = vld [vmem:[#allocation6] sm:$0xf]
    %v38 = vld [vmem:[#allocation6 + $0x4] sm:$0xf]
    %v39 = vld [vmem:[#allocation6 + $0x8] sm:$0xf]
    %v40 = vld [vmem:[#allocation6 + $0xc] sm:$0xf]
    %v41 = vld [vmem:[#allocation6 + $0x10] sm:$0xf]
    %v42 = vld [vmem:[#allocation6 + $0x14] sm:$0xf]
    %v43 = vld [vmem:[#allocation6 + $0x18] sm:$0xf]
    %v44 = vld [vmem:[#allocation6 + $0x1c] sm:$0xf]
    %s45 = sld [smem:[#allocation2 + $0x1e]]
    %s46 = sld [smem:[#allocation2]]
    %v47 = vstv %s46
    %v48 = vmul.f32 %v37, %v47
    %v49 = vmul.f32 %v38, %v47
    %v50 = vmul.f32 %v39, %v47
    %v51 = vmul.f32 %v40, %v47
    %v52 = vmul.f32 %v41, %v47
    %v53 = vmul.f32 %v42, %v47
    %v54 = vmul.f32 %v43, %v47
    %v55 = vmul.f32 %v44, %v47
    %s56 = sld [smem:[#allocation2 + $0xa]]
    %v57 = vstv %s56
    %v58 = vadd.f32 %v48, %v57
    %v59 = vadd.f32 %v49, %v57
    %v60 = vadd.f32 %v50, %v57
    %v61 = vadd.f32 %v51, %v57
    %v62 = vadd.f32 %v52, %v57
    %v63 = vadd.f32 %v53, %v57
    %v64 = vadd.f32 %v54, %v57
    %v65 = vadd.f32 %v55, %v57
    %v66 = vmax.f32 %v58, 0.0
    %v67 = vmax.f32 %v59, 0.0
    %v68 = vmax.f32 %v60, 0.0
    %v69 = vmax.f32 %v61, 0.0
    %v70 = vmax.f32 %v62, 0.0
    %v71 = vmax.f32 %v63, 0.0
    %v72 = vmax.f32 %v64, 0.0
    %v73 = vmax.f32 %v65, 0.0
    %s74 = sld [smem:[#allocation2 + $0x14]]
    %v75 = vstv %s74
    %v76 = vmul.f32 %v66, %v75
    %v77 = vmul.f32 %v67, %v75
    %v78 = vmul.f32 %v68, %v75
    %v79 = vmul.f32 %v69, %v75
    %v80 = vmul.f32 %v70, %v75
    %v81 = vmul.f32 %v71, %v75
    %v82 = vmul.f32 %v72, %v75
    %v83 = vmul.f32 %v73, %v75
    %v84 = vstv %s45
    %v85 = vadd.f32 %v76, %v84
    %v86 = vadd.f32 %v77, %v84
    %v87 = vadd.f32 %v78, %v84
    %v88 = vadd.f32 %v79, %v84
    %v89 = vadd.f32 %v80, %v84
    %v90 = vadd.f32 %v81, %v84
    %v91 = vadd.f32 %v82, %v84
    %v92 = vadd.f32 %v83, %v84
    %s93 = sld [smem:[#allocation2 + $0x1]]
    %v94 = vstv %s93
    %v95 = vmul.f32 %v37, %v94
    %v96 = vmul.f32 %v38, %v94
    %v97 = vmul.f32 %v39, %v94
    %v98 = vmul.f32 %v40, %v94
    %v99 = vmul.f32 %v41, %v94
    %v100 = vmul.f32 %v42, %v94
    %v101 = vmul.f32 %v43, %v94
    %v102 = vmul.f32 %v44, %v94
    %s103 = sld [smem:[#allocation2 + $0xb]]
    %v104 = vstv %s103
    %v105 = vadd.f32 %v95, %v104
    %v106 = vadd.f32 %v96, %v104
    %v107 = vadd.f32 %v97, %v104
    %v108 = vadd.f32 %v98, %v104
    %v109 = vadd.f32 %v99, %v104
    %v110 = vadd.f32 %v100, %v104
    %v111 = vadd.f32 %v101, %v104
    %v112 = vadd.f32 %v102, %v104
    %v113 = vmax.f32 %v105, 0.0
    %v114 = vmax.f32 %v106, 0.0
    %v115 = vmax.f32 %v107, 0.0
    %v116 = vmax.f32 %v108, 0.0
    %v117 = vmax.f32 %v109, 0.0
    %v118 = vmax.f32 %v110, 0.0
    %v119 = vmax.f32 %v111, 0.0
    %v120 = vmax.f32 %v112, 0.0
    %s121 = sld [smem:[#allocation2 + $0x15]]
    %v122 = vstv %s121
    %v123 = vmul.f32 %v113, %v122
    %v124 = vmul.f32 %v114, %v122
    %v125 = vmul.f32 %v115, %v122
    %v126 = vmul.f32 %v116, %v122
    %v127 = vmul.f32 %v117, %v122
    %v128 = vmul.f32 %v118, %v122
    %v129 = vmul.f32 %v119, %v122
    %v130 = vmul.f32 %v120, %v122
    %v131 = vadd.f32 %v85, %v123
    %v132 = vadd.f32 %v86, %v124
    %v133 = vadd.f32 %v87, %v125
    %v134 = vadd.f32 %v88, %v126
    %v135 = vadd.f32 %v89, %v127
    %v136 = vadd.f32 %v90, %v128
    %v137 = vadd.f32 %v91, %v129
    %v138 = vadd.f32 %v92, %v130
    %s139 = sld [smem:[#allocation2 + $0x2]]
    %v140 = vstv %s139
    %v141 = vmul.f32 %v37, %v140
    %v142 = vmul.f32 %v38, %v140
    %v143 = vmul.f32 %v39, %v140
    %v144 = vmul.f32 %v40, %v140
    %v145 = vmul.f32 %v41, %v140
    %v146 = vmul.f32 %v42, %v140
    %v147 = vmul.f32 %v43, %v140
    %v148 = vmul.f32 %v44, %v140
    %s149 = sld [smem:[#allocation2 + $0xc]]
    %v150 = vstv %s149
    %v151 = vadd.f32 %v141, %v150
    %v152 = vadd.f32 %v142, %v150
    %v153 = vadd.f32 %v143, %v150
    %v154 = vadd.f32 %v144, %v150
    %v155 = vadd.f32 %v145, %v150
    %v156 = vadd.f32 %v146, %v150
    %v157 = vadd.f32 %v147, %v150
    %v158 = vadd.f32 %v148, %v150
    %v159 = vmax.f32 %v151, 0.0
    %v160 = vmax.f32 %v152, 0.0
    %v161 = vmax.f32 %v153, 0.0
    %v162 = vmax.f32 %v154, 0.0
    %v163 = vmax.f32 %v155, 0.0
    %v164 = vmax.f32 %v156, 0.0
    %v165 = vmax.f32 %v157, 0.0
    %v166 = vmax.f32 %v158, 0.0
    %s167 = sld [smem:[#allocation2 + $0x16]]
    %v168 = vstv %s167
    %v169 = vmul.f32 %v159, %v168
    %v170 = vmul.f32 %v160, %v168
    %v171 = vmul.f32 %v161, %v168
    %v172 = vmul.f32 %v162, %v168
    %v173 = vmul.f32 %v163, %v168
    %v174 = vmul.f32 %v164, %v168
    %v175 = vmul.f32 %v165, %v168
    %v176 = vmul.f32 %v166, %v168
    %v177 = vadd.f32 %v131, %v169
    %v178 = vadd.f32 %v132, %v170
    %v179 = vadd.f32 %v133, %v171
    %v180 = vadd.f32 %v134, %v172
    %v181 = vadd.f32 %v135, %v173
    %v182 = vadd.f32 %v136, %v174
    %v183 = vadd.f32 %v137, %v175
    %v184 = vadd.f32 %v138, %v176
    %s185 = sld [smem:[#allocation2 + $0x3]]
    %v186 = vstv %s185
    %v187 = vmul.f32 %v37, %v186
    %v188 = vmul.f32 %v38, %v186
    %v189 = vmul.f32 %v39, %v186
    %v190 = vmul.f32 %v40, %v186
    %v191 = vmul.f32 %v41, %v186
    %v192 = vmul.f32 %v42, %v186
    %v193 = vmul.f32 %v43, %v186
    %v194 = vmul.f32 %v44, %v186
    %s195 = sld [smem:[#allocation2 + $0xd]]
    %v196 = vstv %s195
    %v197 = vadd.f32 %v187, %v196
    %v198 = vadd.f32 %v188, %v196
    %v199 = vadd.f32 %v189, %v196
    %v200 = vadd.f32 %v190, %v196
    %v201 = vadd.f32 %v191, %v196
    %v202 = vadd.f32 %v192, %v196
    %v203 = vadd.f32 %v193, %v196
    %v204 = vadd.f32 %v194, %v196
    %v205 = vmax.f32 %v197, 0.0
    %v206 = vmax.f32 %v198, 0.0
    %v207 = vmax.f32 %v199, 0.0
    %v208 = vmax.f32 %v200, 0.0
    %v209 = vmax.f32 %v201, 0.0
    %v210 = vmax.f32 %v202, 0.0
    %v211 = vmax.f32 %v203, 0.0
    %v212 = vmax.f32 %v204, 0.0
    %s213 = sld [smem:[#allocation2 + $0x17]]
    %v214 = vstv %s213
    %v215 = vmul.f32 %v205, %v214
    %v216 = vmul.f32 %v206, %v214
    %v217 = vmul.f32 %v207, %v214
    %v218 = vmul.f32 %v208, %v214
    %v219 = vmul.f32 %v209, %v214
    %v220 = vmul.f32 %v210, %v214
    %v221 = vmul.f32 %v211, %v214
    %v222 = vmul.f32 %v212, %v214
    %v223 = vadd.f32 %v177, %v215
    %v224 = vadd.f32 %v178, %v216
    %v225 = vadd.f32 %v179, %v217
    %v226 = vadd.f32 %v180, %v218
    %v227 = vadd.f32 %v181, %v219
    %v228 = vadd.f32 %v182, %v220
    %v229 = vadd.f32 %v183, %v221
    %v230 = vadd.f32 %v184, %v222
    %s231 = sld [smem:[#allocation2 + $0x4]]
    %v232 = vstv %s231
    %v233 = vmul.f32 %v37, %v232
    %v234 = vmul.f32 %v38, %v232
    %v235 = vmul.f32 %v39, %v232
    %v236 = vmul.f32 %v40, %v232
    %v237 = vmul.f32 %v41, %v232
    %v238 = vmul.f32 %v42, %v232
    %v239 = vmul.f32 %v43, %v232
    %v240 = vmul.f32 %v44, %v232
    %s241 = sld [smem:[#allocation2 + $0xe]]
    %v242 = vstv %s241
    %v243 = vadd.f32 %v233, %v242
    %v244 = vadd.f32 %v234, %v242
    %v245 = vadd.f32 %v235, %v242
    %v246 = vadd.f32 %v236, %v242
    %v247 = vadd.f32 %v237, %v242
    %v248 = vadd.f32 %v238, %v242
    %v249 = vadd.f32 %v239, %v242
    %v250 = vadd.f32 %v240, %v242
    %v251 = vmax.f32 %v243, 0.0
    %v252 = vmax.f32 %v244, 0.0
    %v253 = vmax.f32 %v245, 0.0
    %v254 = vmax.f32 %v246, 0.0
    %v255 = vmax.f32 %v247, 0.0
    %v256 = vmax.f32 %v248, 0.0
    %v257 = vmax.f32 %v249, 0.0
    %v258 = vmax.f32 %v250, 0.0
    %s259 = sld [smem:[#allocation2 + $0x18]]
    %v260 = vstv %s259
    %v261 = vmul.f32 %v251, %v260
    %v262 = vmul.f32 %v252, %v260
    %v263 = vmul.f32 %v253, %v260
    %v264 = vmul.f32 %v254, %v260
    %v265 = vmul.f32 %v255, %v260
    %v266 = vmul.f32 %v256, %v260
    %v267 = vmul.f32 %v257, %v260
    %v268 = vmul.f32 %v258, %v260
    %v269 = vadd.f32 %v223, %v261
    %v270 = vadd.f32 %v224, %v262
    %v271 = vadd.f32 %v225, %v263
    %v272 = vadd.f32 %v226, %v264
    %v273 = vadd.f32 %v227, %v265
    %v274 = vadd.f32 %v228, %v266
    %v275 = vadd.f32 %v229, %v267
    %v276 = vadd.f32 %v230, %v268
    %s277 = sld [smem:[#allocation2 + $0x5]]
    %v278 = vstv %s277
    %v279 = vmul.f32 %v37, %v278
    %v280 = vmul.f32 %v38, %v278
    %v281 = vmul.f32 %v39, %v278
    %v282 = vmul.f32 %v40, %v278
    %v283 = vmul.f32 %v41, %v278
    %v284 = vmul.f32 %v42, %v278
    %v285 = vmul.f32 %v43, %v278
    %v286 = vmul.f32 %v44, %v278
    %s287 = sld [smem:[#allocation2 + $0xf]]
    %v288 = vstv %s287
    %v289 = vadd.f32 %v279, %v288
    %v290 = vadd.f32 %v280, %v288
    %v291 = vadd.f32 %v281, %v288
    %v292 = vadd.f32 %v282, %v288
    %v293 = vadd.f32 %v283, %v288
    %v294 = vadd.f32 %v284, %v288
    %v295 = vadd.f32 %v285, %v288
    %v296 = vadd.f32 %v286, %v288
    %v297 = vmax.f32 %v289, 0.0
    %v298 = vmax.f32 %v290, 0.0
    %v299 = vmax.f32 %v291, 0.0
    %v300 = vmax.f32 %v292, 0.0
    %v301 = vmax.f32 %v293, 0.0
    %v302 = vmax.f32 %v294, 0.0
    %v303 = vmax.f32 %v295, 0.0
    %v304 = vmax.f32 %v296, 0.0
    %s305 = sld [smem:[#allocation2 + $0x19]]
    %v306 = vstv %s305
    %v307 = vmul.f32 %v297, %v306
    %v308 = vmul.f32 %v298, %v306
    %v309 = vmul.f32 %v299, %v306
    %v310 = vmul.f32 %v300, %v306
    %v311 = vmul.f32 %v301, %v306
    %v312 = vmul.f32 %v302, %v306
    %v313 = vmul.f32 %v303, %v306
    %v314 = vmul.f32 %v304, %v306
    %v315 = vadd.f32 %v269, %v307
    %v316 = vadd.f32 %v270, %v308
    %v317 = vadd.f32 %v271, %v309
    %v318 = vadd.f32 %v272, %v310
    %v319 = vadd.f32 %v273, %v311
    %v320 = vadd.f32 %v274, %v312
    %v321 = vadd.f32 %v275, %v313
    %v322 = vadd.f32 %v276, %v314
    %s323 = sld [smem:[#allocation2 + $0x6]]
    %v324 = vstv %s323
    %v325 = vmul.f32 %v37, %v324
    %v326 = vmul.f32 %v38, %v324
    %v327 = vmul.f32 %v39, %v324
    %v328 = vmul.f32 %v40, %v324
    %v329 = vmul.f32 %v41, %v324
    %v330 = vmul.f32 %v42, %v324
    %v331 = vmul.f32 %v43, %v324
    %v332 = vmul.f32 %v44, %v324
    %s333 = sld [smem:[#allocation2 + $0x10]]
    %v334 = vstv %s333
    %v335 = vadd.f32 %v325, %v334
    %v336 = vadd.f32 %v326, %v334
    %v337 = vadd.f32 %v327, %v334
    %v338 = vadd.f32 %v328, %v334
    %v339 = vadd.f32 %v329, %v334
    %v340 = vadd.f32 %v330, %v334
    %v341 = vadd.f32 %v331, %v334
    %v342 = vadd.f32 %v332, %v334
    %v343 = vmax.f32 %v335, 0.0
    %v344 = vmax.f32 %v336, 0.0
    %v345 = vmax.f32 %v337, 0.0
    %v346 = vmax.f32 %v338, 0.0
    %v347 = vmax.f32 %v339, 0.0
    %v348 = vmax.f32 %v340, 0.0
    %v349 = vmax.f32 %v341, 0.0
    %v350 = vmax.f32 %v342, 0.0
    %s351 = sld [smem:[#allocation2 + $0x1a]]
    %v352 = vstv %s351
    %v353 = vmul.f32 %v343, %v352
    %v354 = vmul.f32 %v344, %v352
    %v355 = vmul.f32 %v345, %v352
    %v356 = vmul.f32 %v346, %v352
    %v357 = vmul.f32 %v347, %v352
    %v358 = vmul.f32 %v348, %v352
    %v359 = vmul.f32 %v349, %v352
    %v360 = vmul.f32 %v350, %v352
    %v361 = vadd.f32 %v315, %v353
    %v362 = vadd.f32 %v316, %v354
    %v363 = vadd.f32 %v317, %v355
    %v364 = vadd.f32 %v318, %v356
    %v365 = vadd.f32 %v319, %v357
    %v366 = vadd.f32 %v320, %v358
    %v367 = vadd.f32 %v321, %v359
    %v368 = vadd.f32 %v322, %v360
    %s369 = sld [smem:[#allocation2 + $0x7]]
    %v370 = vstv %s369
    %v371 = vmul.f32 %v37, %v370
    %v372 = vmul.f32 %v38, %v370
    %v373 = vmul.f32 %v39, %v370
    %v374 = vmul.f32 %v40, %v370
    %v375 = vmul.f32 %v41, %v370
    %v376 = vmul.f32 %v42, %v370
    %v377 = vmul.f32 %v43, %v370
    %v378 = vmul.f32 %v44, %v370
    %s379 = sld [smem:[#allocation2 + $0x11]]
    %v380 = vstv %s379
    %v381 = vadd.f32 %v371, %v380
    %v382 = vadd.f32 %v372, %v380
    %v383 = vadd.f32 %v373, %v380
    %v384 = vadd.f32 %v374, %v380
    %v385 = vadd.f32 %v375, %v380
    %v386 = vadd.f32 %v376, %v380
    %v387 = vadd.f32 %v377, %v380
    %v388 = vadd.f32 %v378, %v380
    %v389 = vmax.f32 %v381, 0.0
    %v390 = vmax.f32 %v382, 0.0
    %v391 = vmax.f32 %v383, 0.0
    %v392 = vmax.f32 %v384, 0.0
    %v393 = vmax.f32 %v385, 0.0
    %v394 = vmax.f32 %v386, 0.0
    %v395 = vmax.f32 %v387, 0.0
    %v396 = vmax.f32 %v388, 0.0
    %s397 = sld [smem:[#allocation2 + $0x1b]]
    %v398 = vstv %s397
    %v399 = vmul.f32 %v389, %v398
    %v400 = vmul.f32 %v390, %v398
    %v401 = vmul.f32 %v391, %v398
    %v402 = vmul.f32 %v392, %v398
    %v403 = vmul.f32 %v393, %v398
    %v404 = vmul.f32 %v394, %v398
    %v405 = vmul.f32 %v395, %v398
    %v406 = vmul.f32 %v396, %v398
    %v407 = vadd.f32 %v361, %v399
    %v408 = vadd.f32 %v362, %v400
    %v409 = vadd.f32 %v363, %v401
    %v410 = vadd.f32 %v364, %v402
    %v411 = vadd.f32 %v365, %v403
    %v412 = vadd.f32 %v366, %v404
    %v413 = vadd.f32 %v367, %v405
    %v414 = vadd.f32 %v368, %v406
    %s415 = sld [smem:[#allocation2 + $0x8]]
    %v416 = vstv %s415
    %v417 = vmul.f32 %v37, %v416
    %v418 = vmul.f32 %v38, %v416
    %v419 = vmul.f32 %v39, %v416
    %v420 = vmul.f32 %v40, %v416
    %v421 = vmul.f32 %v41, %v416
    %v422 = vmul.f32 %v42, %v416
    %v423 = vmul.f32 %v43, %v416
    %v424 = vmul.f32 %v44, %v416
    %s425 = sld [smem:[#allocation2 + $0x12]]
    %v426 = vstv %s425
    %v427 = vadd.f32 %v417, %v426
    %v428 = vadd.f32 %v418, %v426
    %v429 = vadd.f32 %v419, %v426
    %v430 = vadd.f32 %v420, %v426
    %v431 = vadd.f32 %v421, %v426
    %v432 = vadd.f32 %v422, %v426
    %v433 = vadd.f32 %v423, %v426
    %v434 = vadd.f32 %v424, %v426
    %v435 = vmax.f32 %v427, 0.0
    %v436 = vmax.f32 %v428, 0.0
    %v437 = vmax.f32 %v429, 0.0
    %v438 = vmax.f32 %v430, 0.0
    %v439 = vmax.f32 %v431, 0.0
    %v440 = vmax.f32 %v432, 0.0
    %v441 = vmax.f32 %v433, 0.0
    %v442 = vmax.f32 %v434, 0.0
    %s443 = sld [smem:[#allocation2 + $0x1c]]
    %v444 = vstv %s443
    %v445 = vmul.f32 %v435, %v444
    %v446 = vmul.f32 %v436, %v444
    %v447 = vmul.f32 %v437, %v444
    %v448 = vmul.f32 %v438, %v444
    %v449 = vmul.f32 %v439, %v444
    %v450 = vmul.f32 %v440, %v444
    %v451 = vmul.f32 %v441, %v444
    %v452 = vmul.f32 %v442, %v444
    %v453 = vadd.f32 %v407, %v445
    %v454 = vadd.f32 %v408, %v446
    %v455 = vadd.f32 %v409, %v447
    %v456 = vadd.f32 %v410, %v448
    %v457 = vadd.f32 %v411, %v449
    %v458 = vadd.f32 %v412, %v450
    %v459 = vadd.f32 %v413, %v451
    %v460 = vadd.f32 %v414, %v452
    %s461 = sld [smem:[#allocation2 + $0x9]]
    %v462 = vstv %s461
    %v463 = vmul.f32 %v37, %v462
    %v464 = vmul.f32 %v38, %v462
    %v465 = vmul.f32 %v39, %v462
    %v466 = vmul.f32 %v40, %v462
    %v467 = vmul.f32 %v41, %v462
    %v468 = vmul.f32 %v42, %v462
    %v469 = vmul.f32 %v43, %v462
    %v470 = vmul.f32 %v44, %v462
    %s471 = sld [smem:[#allocation2 + $0x13]]
    %v472 = vstv %s471
    %v473 = vadd.f32 %v463, %v472
    %v474 = vadd.f32 %v464, %v472
    %v475 = vadd.f32 %v465, %v472
    %v476 = vadd.f32 %v466, %v472
    %v477 = vadd.f32 %v467, %v472
    %v478 = vadd.f32 %v468, %v472
    %v479 = vadd.f32 %v469, %v472
    %v480 = vadd.f32 %v470, %v472
    %v481 = vmax.f32 %v473, 0.0
    %v482 = vmax.f32 %v474, 0.0
    %v483 = vmax.f32 %v475, 0.0
    %v484 = vmax.f32 %v476, 0.0
    %v485 = vmax.f32 %v477, 0.0
    %v486 = vmax.f32 %v478, 0.0
    %v487 = vmax.f32 %v479, 0.0
    %v488 = vmax.f32 %v480, 0.0
    %s489 = sld [smem:[#allocation2 + $0x1d]]
    %v490 = vstv %s489
    %v491 = vmul.f32 %v481, %v490
    %v492 = vmul.f32 %v482, %v490
    %v493 = vmul.f32 %v483, %v490
    %v494 = vmul.f32 %v484, %v490
    %v495 = vmul.f32 %v485, %v490
    %v496 = vmul.f32 %v486, %v490
    %v497 = vmul.f32 %v487, %v490
    %v498 = vmul.f32 %v488, %v490
    %v499 = vadd.f32 %v453, %v491
    %v500 = vadd.f32 %v454, %v492
    %v501 = vadd.f32 %v455, %v493
    %v502 = vadd.f32 %v456, %v494
    %v503 = vadd.f32 %v457, %v495
    %v504 = vadd.f32 %v458, %v496
    %v505 = vadd.f32 %v459, %v497
    %v506 = vadd.f32 %v460, %v498
    %v507 = vlaneseq
    %vm508 = vcmp.ge.s32.totalorder %v507, 0
    %vm509 = vcmp.lt.s32.totalorder %v507, 512
    %vm510 = vmand %vm508, %vm509
    %511 = vst.msk [vmem:[#allocation7] sm:$0xf] %vm510, %v499
    %512 = vst.msk [vmem:[#allocation7 + $0x4] sm:$0xf] %vm510, %v500
    %513 = vst.msk [vmem:[#allocation7 + $0x8] sm:$0xf] %vm510, %v501
    %514 = vst.msk [vmem:[#allocation7 + $0xc] sm:$0xf] %vm510, %v502
    %515 = vst.msk [vmem:[#allocation7 + $0x10] sm:$0xf] %vm510, %v503
    %516 = vst.msk [vmem:[#allocation7 + $0x14] sm:$0xf] %vm510, %v504
    %517 = vst.msk [vmem:[#allocation7 + $0x18] sm:$0xf] %vm510, %v505
    %518 = vst.msk [vmem:[#allocation7 + $0x1c] sm:$0xf] %vm510, %v506
    // Predicated region
    $region18: #{tpu_custom_call.1} parent=1 // pred_check
      _
    $region19: #{tpu_custom_call.1} parent=1 // pred_check_branch
      %520 = sbr.rel (0) target = $region21
    $region20: #{tpu_custom_call.1} parent=1 // pred_region
      %s522 = ssub.s32 512, 64
      %523 = vsyncadd [#allocation4], %s522
      %s524 = sshll.u32 [#allocation7], 4
      %s525 = int_to_ptr.vmem [resolvable:$true] %s524
      %530 = dma.vmem_to_hbm [thread:$0]  %s525, 64, %s2, [#allocation4], 64, 64, 4
    $region21: #{tpu_custom_call.1} parent=1 // pred_fallthru
      _
    // Predicated region
    $region22: #{tpu_custom_call.1} parent=1 // pred_check
      _
    $region23: #{tpu_custom_call.1} parent=1 // pred_check_branch
      %532 = sbr.rel (0) target = $region25
    $region24: #{tpu_custom_call.1} parent=1 // pred_region
      %533 = dma.done [#allocation4], 512
    $region25: #{tpu_custom_call.1} parent=1 // pred_fallthru
      _
    %534 = vsyncpa [#allocation3], 1
    %535 = vsyncpa [#allocation4], 1
    %536 = vsyncpa [#allocation5], 1

</llo_original>
